<compile_context>
chip_gen: v5e
topology: v5e:2x2
jax: 0.10.0
libtpu: 0.0.40
codegen_flags: <defaults>
</compile_context>

<pallas_src>
import functools

import jax
import jax.numpy as jnp
from jax.experimental import pallas as pl
from jax.experimental.pallas import tpu as pltpu

EPS = 1e-5


def _vmem_limit_bytes():
    """Generation-aware scoped-VMEM limit (v7x has 64 MiB/TC, v5e/v6e 128 MiB)."""
    try:
        cap = int(pltpu.get_tpu_info().vmem_capacity_bytes)
    except Exception:
        cap = 128 * 1024 * 1024
    return int(min(cap * 3 // 4, 96 * 1024 * 1024))


def _pick_tiles(R, L, block_budget_bytes):
    """Pick (row_tile, lane_tile) for a (R, L) f32 array.

    Lane tile is a multiple of 128 (or the full L when L < 128); row tile is a
    multiple of 8 (or the full R when R < 8).  Sized so one block stays inside
    `block_budget_bytes` (~2-4 MiB) so double-buffered streams fit VMEM.
    """
    itemsize = 4
    if L <= 128:
        tl = L
    else:
        tl = (L // 128) * 128
        max_tl = max(128, ((block_budget_bytes // (8 * itemsize)) // 128) * 128)
        tl = min(tl, max_tl)
    if R <= 8:
        tr = R
    else:
        tr = (R // 8) * 8
        max_tr = max(8, ((block_budget_bytes // (tl * itemsize)) // 8) * 8)
        tr = min(tr, max_tr)
    return tr, tl


def _stats_kernel(x_ref, sum_ref, ss_ref, *, L, tl, need_mask):
    """Per-(row-tile, L-tile) partial sum and mean-shifted sum of squares."""
    x = x_ref[...]                                             # (tr, tl) f32
    if need_mask:
        l = pl.program_id(1)
        rem = jnp.minimum(tl, L - l * tl)                      # valid lanes
        lane = jax.lax.broadcasted_iota(jnp.int32, x.shape, 1)
        mask = lane < rem
        xm = jnp.where(mask, x, 0.0)
        cnt = rem.astype(jnp.float32)
    else:
        mask = None
        xm = x
        cnt = jnp.float32(tl)

    s = jnp.sum(xm, axis=-1, keepdims=True)                    # (tr, 1)
    mu = s / cnt                                               # block-local mean
    d = x - mu
    if need_mask:
        d = jnp.where(mask, d, 0.0)
    ss = jnp.sum(d * d, axis=-1, keepdims=True)                # (tr, 1)

    sum_ref[0] = s
    ss_ref[0] = ss


def _norm_kernel(x_ref, p_ref, o_ref):
    """Elementwise folded scale/shift: out = x * scale + shift (per row)."""
    o_ref[...] = x_ref[...] * p_ref[0] + p_ref[1]


def complex_batch_norm_1d(x, w_r, b_r, w_i, b_i, *, eps=EPS):
    """x: complex64 (N, C, L); params: float32 (C,).  Returns complex64 (N, C, L)."""
    N, C, L = x.shape
    R = 2 * N * C

    # Single fused split: read complex once, write one f32 (R, L) array.
    x_flat = jnp.stack([jnp.real(x), jnp.imag(x)], axis=0).astype(jnp.float32)
    x_flat = x_flat.reshape(R, L)

    vmem_limit = _vmem_limit_bytes()
    block_budget = min(4 * 1024 * 1024, vmem_limit // 12)
    tr, tl = _pick_tiles(R, L, block_budget)
    n_r = pl.cdiv(R, tr)
    n_l = pl.cdiv(L, tl)
    need_mask = (n_l * tl != L)

    x_spec = pl.BlockSpec((tr, tl), lambda r, l: (r, l))
    stat_spec = pl.BlockSpec((1, tr, 1), lambda r, l: (l, r, 0))

    # ---- pass 1: per-block partial sums / mean-shifted sums of squares ------
    sums, ssqs = pl.pallas_call(
        functools.partial(_stats_kernel, L=L, tl=tl, need_mask=need_mask),
        grid=(n_r, n_l),
        in_specs=[x_spec],
        out_specs=(stat_spec, stat_spec),
        out_shape=(jax.ShapeDtypeStruct((n_l, R, 1), jnp.float32),
                   jax.ShapeDtypeStruct((n_l, R, 1), jnp.float32)),
        compiler_params=pltpu.CompilerParams(
            dimension_semantics=("parallel", "parallel"),
            vmem_limit_bytes=vmem_limit),
    )(x_flat)

    # ---- tiny per-channel combine (Chan's parallel variance) in XLA ---------
    M = float(N * L)
    counts = [float(tl)] * n_l
    if need_mask:
        counts[-1] = float(L - (n_l - 1) * tl)
    cnt = jnp.asarray(counts, dtype=jnp.float32).reshape(n_l, 1, 1, 1)

    sums4 = sums.reshape(n_l, 2, N, C)
    ssqs4 = ssqs.reshape(n_l, 2, N, C)

    mean = jnp.sum(sums4, axis=(0, 2)) / M                     # (2, C)
    mu_b = sums4 / cnt                                         # (n_l, 2, N, C)
    dev = mu_b - mean[None, :, None, :]
    ss = jnp.sum(ssqs4 + cnt * dev * dev, axis=(0, 2))         # (2, C)
    var = ss / M                                               # biased variance
    inv = jax.lax.rsqrt(var + eps)

    w = jnp.stack([w_r, w_i], axis=0).astype(jnp.float32)      # (2, C)
    b = jnp.stack([b_r, b_i], axis=0).astype(jnp.float32)
    scale = w * inv
    shift = b - mean * scale

    # Per-row folded params, packed into a single (2, R, 1) input stream.
    scale_row = jnp.broadcast_to(scale[:, None, :], (2, N, C)).reshape(R)
    shift_row = jnp.broadcast_to(shift[:, None, :], (2, N, C)).reshape(R)
    params = jnp.stack([scale_row, shift_row], axis=0).reshape(2, R, 1)

    par_spec = pl.BlockSpec((2, tr, 1), lambda r, l: (0, r, 0))

    # ---- pass 2: elementwise normalize + affine (fully parallel grid) -------
    out_flat = pl.pallas_call(
        _norm_kernel,
        grid=(n_r, n_l),
        in_specs=[x_spec, par_spec],
        out_specs=x_spec,
        out_shape=jax.ShapeDtypeStruct((R, L), jnp.float32),
        compiler_params=pltpu.CompilerParams(
            dimension_semantics=("parallel", "parallel"),
            vmem_limit_bytes=vmem_limit),
    )(x_flat, params)

    out = out_flat.reshape(2, N, C, L)
    return jax.lax.complex(out[0], out[1])


def _reference(x, w_r, b_r, w_i, b_i, eps=EPS):
    """Pure-JAX reference of PyTorch training-mode ComplexBatchNorm1d."""
    def bn(v, w, b):
        mean = jnp.mean(v, axis=(0, 2), keepdims=True)
        var = jnp.mean((v - mean) ** 2, axis=(0, 2), keepdims=True)  # biased
        return (v - mean) / jnp.sqrt(var + eps) * w[None, :, None] + b[None, :, None]
    return bn(jnp.real(x), w_r, b_r) + 1j * bn(jnp.imag(x), w_i, b_i)


if __name__ == "__main__":
    key = jax.random.PRNGKey(0)
    k1, k2, k3, k4, k5, k6 = jax.random.split(key, 6)

    N, C, L = 2, 4, 16   # batch, num_features, sequence length

    xr = jax.random.normal(k1, (N, C, L), dtype=jnp.float32)
    xi = jax.random.normal(k2, (N, C, L), dtype=jnp.float32)
    # Nonzero means so the mean/variance paths are genuinely exercised.
    x = ((xr + 0.5) + 1j * (xi - 0.25)).astype(jnp.complex64)

    # Non-trivial affine params to exercise the affine path.
    w_r = 1.0 + 0.1 * jax.random.normal(k3, (C,), dtype=jnp.float32)
    b_r = 0.1 * jax.random.normal(k4, (C,), dtype=jnp.float32)
    w_i = 1.0 + 0.1 * jax.random.normal(k5, (C,), dtype=jnp.float32)
    b_i = 0.1 * jax.random.normal(k6, (C,), dtype=jnp.float32)

    out = jax.jit(complex_batch_norm_1d)(x, w_r, b_r, w_i, b_i)
    out = jax.block_until_ready(out)

    ref = _reference(x, w_r, b_r, w_i, b_i)
    assert out.shape == (N, C, L) and out.dtype == jnp.complex64
    assert jnp.max(jnp.abs(out - ref)) < 1e-4, "mismatch vs reference"

    print("KERNEL_OK")
</pallas_src>

<mosaic_0001>
module attributes {stable_mosaic.version = 11 : i64} {
  func.func @_stats_kernel(%arg0: i32, %arg1: i32, %arg2: memref<16x16xf32, #tpu.memory_space<vmem>>, %arg3: memref<1x16x1xf32, #tpu.memory_space<vmem>>, %arg4: memref<1x16x1xf32, #tpu.memory_space<vmem>>) attributes {dimension_semantics = [#tpu.dimension_semantics<parallel>, #tpu.dimension_semantics<parallel>], iteration_bounds = array<i64: 1, 1>, scalar_prefetch = 0 : i64, scratch_operands = 0 : i64, tpu.core_type = #tpu.core_type<tc>, window_params = [{transform_indices = @transform_0, window_bounds = array<i64: 16, 16>}, {transform_indices = @transform_1, window_bounds = array<i64: 1, 16, 1>}, {transform_indices = @transform_2, window_bounds = array<i64: 1, 16, 1>}]} {
    %c0 = arith.constant 0 : index
    %c0_0 = arith.constant 0 : index
    %0 = vector.load %arg2[%c0, %c0_0] : memref<16x16xf32, #tpu.memory_space<vmem>>, vector<16x16xf32>
    %cst = arith.constant dense<0.000000e+00> : vector<16xf32>
    %1 = vector.multi_reduction <add>, %0, %cst [1] : vector<16x16xf32> to vector<16xf32>
    %2 = vector.shape_cast %1 : vector<16xf32> to vector<16x1xf32>
    %cst_1 = arith.constant 1.600000e+01 : f32
    %3 = vector.broadcast %cst_1 : f32 to vector<16x1xf32>
    %4 = arith.divf %2, %3 : vector<16x1xf32>
    %5 = vector.broadcast %4 : vector<16x1xf32> to vector<16x16xf32>
    %6 = arith.subf %0, %5 : vector<16x16xf32>
    %7 = arith.mulf %6, %6 : vector<16x16xf32>
    %cst_2 = arith.constant dense<0.000000e+00> : vector<16xf32>
    %8 = vector.multi_reduction <add>, %7, %cst_2 [1] : vector<16x16xf32> to vector<16xf32>
    %9 = vector.shape_cast %8 : vector<16xf32> to vector<16x1xf32>
    %c0_3 = arith.constant 0 : index
    %c0_4 = arith.constant 0 : index
    %c0_5 = arith.constant 0 : index
    %10 = vector.load %arg3[%c0_3, %c0_4, %c0_5] : memref<1x16x1xf32, #tpu.memory_space<vmem>>, vector<1x16x1xf32>
    %11 = vector.shape_cast %10 : vector<1x16x1xf32> to vector<16x1xf32>
    %12 = vector.shape_cast %2 : vector<16x1xf32> to vector<1x16x1xf32>
    tpu.vector_store %arg3[%c0_3, %c0_4, %c0_5], %12 {strides = array<i32>} : memref<1x16x1xf32, #tpu.memory_space<vmem>>, vector<1x16x1xf32>,
    %c0_6 = arith.constant 0 : index
    %c0_7 = arith.constant 0 : index
    %c0_8 = arith.constant 0 : index
    %13 = vector.load %arg4[%c0_6, %c0_7, %c0_8] : memref<1x16x1xf32, #tpu.memory_space<vmem>>, vector<1x16x1xf32>
    %14 = vector.shape_cast %13 : vector<1x16x1xf32> to vector<16x1xf32>
    %15 = vector.shape_cast %9 : vector<16x1xf32> to vector<1x16x1xf32>
    tpu.vector_store %arg4[%c0_6, %c0_7, %c0_8], %15 {strides = array<i32>} : memref<1x16x1xf32, #tpu.memory_space<vmem>>, vector<1x16x1xf32>,
    return
  }
  func.func @transform_0(%arg0: i32, %arg1: i32) -> (i32, i32) {
    %c0_i32 = arith.constant 0 : i32
    return %arg0, %arg1 : i32, i32
  }
  func.func @transform_1(%arg0: i32, %arg1: i32) -> (i32, i32, i32) {
    %c0_i32 = arith.constant 0 : i32
    %c0_i32_0 = arith.constant 0 : i32
    return %arg1, %arg0, %c0_i32 : i32, i32, i32
  }
  func.func @transform_2(%arg0: i32, %arg1: i32) -> (i32, i32, i32) {
    %c0_i32 = arith.constant 0 : i32
    %c0_i32_0 = arith.constant 0 : i32
    return %arg1, %arg0, %c0_i32 : i32, i32, i32
  }
}

module attributes {stable_mosaic.version = 11 : i64} {
  func.func @_norm_kernel(%arg0: i32, %arg1: i32, %arg2: memref<16x16xf32, #tpu.memory_space<vmem>>, %arg3: memref<2x16x1xf32, #tpu.memory_space<vmem>>, %arg4: memref<16x16xf32, #tpu.memory_space<vmem>>) attributes {dimension_semantics = [#tpu.dimension_semantics<parallel>, #tpu.dimension_semantics<parallel>], iteration_bounds = array<i64: 1, 1>, scalar_prefetch = 0 : i64, scratch_operands = 0 : i64, tpu.core_type = #tpu.core_type<tc>, window_params = [{transform_indices = @transform_0, window_bounds = array<i64: 16, 16>}, {transform_indices = @transform_1, window_bounds = array<i64: 2, 16, 1>}, {transform_indices = @transform_2, window_bounds = array<i64: 16, 16>}]} {
    %c0 = arith.constant 0 : index
    %c0_0 = arith.constant 0 : index
    %0 = vector.load %arg2[%c0, %c0_0] : memref<16x16xf32, #tpu.memory_space<vmem>>, vector<16x16xf32>
    %c0_1 = arith.constant 0 : index
    %c0_2 = arith.constant 0 : index
    %c0_3 = arith.constant 0 : index
    %1 = vector.load %arg3[%c0_1, %c0_2, %c0_3] : memref<2x16x1xf32, #tpu.memory_space<vmem>>, vector<1x16x1xf32>
    %2 = vector.shape_cast %1 : vector<1x16x1xf32> to vector<16x1xf32>
    %3 = vector.broadcast %2 : vector<16x1xf32> to vector<16x16xf32>
    %4 = arith.mulf %0, %3 : vector<16x16xf32>
    %c1 = arith.constant 1 : index
    %c0_4 = arith.constant 0 : index
    %c0_5 = arith.constant 0 : index
    %5 = vector.load %arg3[%c1, %c0_4, %c0_5] : memref<2x16x1xf32, #tpu.memory_space<vmem>>, vector<1x16x1xf32>
    %6 = vector.shape_cast %5 : vector<1x16x1xf32> to vector<16x1xf32>
    %7 = vector.broadcast %6 : vector<16x1xf32> to vector<16x16xf32>
    %8 = arith.addf %4, %7 : vector<16x16xf32>
    %c0_6 = arith.constant 0 : index
    %c0_7 = arith.constant 0 : index
    %9 = vector.load %arg4[%c0_6, %c0_7] : memref<16x16xf32, #tpu.memory_space<vmem>>, vector<16x16xf32>
    tpu.vector_store %arg4[%c0_6, %c0_7], %8 {strides = array<i32>} : memref<16x16xf32, #tpu.memory_space<vmem>>, vector<16x16xf32>,
    return
  }
  func.func @transform_0(%arg0: i32, %arg1: i32) -> (i32, i32) {
    %c0_i32 = arith.constant 0 : i32
    return %arg0, %arg1 : i32, i32
  }
  func.func @transform_1(%arg0: i32, %arg1: i32) -> (i32, i32, i32) {
    %c0_i32 = arith.constant 0 : i32
    %c0_i32_0 = arith.constant 0 : i32
    %c0_i32_1 = arith.constant 0 : i32
    return %c0_i32, %arg0, %c0_i32_0 : i32, i32, i32
  }
  func.func @transform_2(%arg0: i32, %arg1: i32) -> (i32, i32) {
    %c0_i32 = arith.constant 0 : i32
    return %arg0, %arg1 : i32, i32
  }
}

</mosaic_0001>

<llo_original>
// kernel: custom-call.1
$region0: #{custom-call.1}
  %s0 = inlined_call_operand.hbm [shape: c64[2,4,16], index: 0, kind: input, shape index: {}]
  %s1 = inlined_call_operand.vmem [shape: f32[2,4,16], index: 1, kind: output, shape index: {}]
  %s2 = scalar_lea.hbm %s0, 8
  $region1: #{custom-call.1} parent=0
    #allocation0 [shape = 's32[1]{0}', space=sflag, size = 0x4, scoped, tag = 'scoped memory for custom-call.1']
    %3 = vsyncpa [#allocation0], 0
    %s5 = sshll.u32 %s2, 4
    %s6 = int_to_ptr.hbm [resolvable:$true] %s5
    %s7 = sshll.u32 %s1, 4
    %s8 = int_to_ptr.vmem [resolvable:$true] %s7
    %10 = dma.hbm_to_vmem [thread:$0]  %s6, 128, %s8, [#allocation0]
    %12 = dma.done [#allocation0], 128
    %13 = vsyncpa [#allocation0], 1

// kernel: custom-call
$region0: #{custom-call}
  %s0 = inlined_call_operand.hbm [shape: c64[2,4,16], index: 0, kind: input, shape index: {}]
  %s1 = inlined_call_operand.vmem [shape: f32[2,4,16], index: 1, kind: output, shape index: {}]
  $region1: #{custom-call} parent=0
    #allocation0 [shape = 's32[1]{0}', space=sflag, size = 0x4, scoped, tag = 'scoped memory for custom-call']
    %2 = vsyncpa [#allocation0], 0
    %s4 = sshll.u32 %s0, 4
    %s5 = int_to_ptr.hbm [resolvable:$true] %s4
    %s6 = sshll.u32 %s1, 4
    %s7 = int_to_ptr.vmem [resolvable:$true] %s6
    %9 = dma.hbm_to_vmem [thread:$0]  %s5, 128, %s7, [#allocation0]
    %11 = dma.done [#allocation0], 128
    %12 = vsyncpa [#allocation0], 1

// kernel: custom-call.2
$region0: #{custom-call.2}
  %s0 = inlined_call_operand.vmem [shape: f32[2,4,16], index: 0, kind: input, shape index: {}]
  %s1 = inlined_call_operand.vmem [shape: f32[2,4,16], index: 1, kind: input, shape index: {}]
  %s2 = inlined_call_operand.hbm [shape: c64[2,4,16], index: 2, kind: output, shape index: {}]
  %s3 = scalar_lea.hbm %s2, 8
  $region1: #{custom-call.2} parent=0
    #allocation0 [shape = 's32[1]{0}', space=sflag, size = 0x4, scoped, tag = 'scoped memory for custom-call.2']
    %4 = vsyncpa [#allocation0], 0
    %s6 = sshll.u32 %s0, 4
    %s7 = int_to_ptr.vmem [resolvable:$true] %s6
    %s8 = sshll.u32 %s2, 4
    %s9 = int_to_ptr.hbm [resolvable:$true] %s8
    %11 = dma.vmem_to_hbm [thread:$0]  %s7, 128, %s9, [#allocation0]
    %13 = dma.done [#allocation0], 128
    %14 = vsyncpa [#allocation0], 1
  $region2: #{custom-call.2} parent=0
    #allocation1 [shape = 's32[1]{0}', space=sflag, size = 0x4, scoped, tag = 'scoped memory for custom-call.2']
    %15 = vsyncpa [#allocation1], 0
    %s17 = sshll.u32 %s1, 4
    %s18 = int_to_ptr.vmem [resolvable:$true] %s17
    %s19 = sshll.u32 %s3, 4
    %s20 = int_to_ptr.hbm [resolvable:$true] %s19
    %22 = dma.vmem_to_hbm [thread:$0]  %s18, 128, %s20, [#allocation1]
    %24 = dma.done [#allocation1], 128
    %25 = vsyncpa [#allocation1], 1

// kernel: complex_batch_norm_1d.3
$region0: #{complex_batch_norm_1d.3}
  #allocation0 [shape = 'u32[]', space=smem, size = 0x4, offset = 0x4, fixed_abs, tag = 'smem constant byte address 0x4 - core index']
  #allocation1 [shape = 'u32[72,128]{1,0:T(1,128)}', space=vmem, size = 0x9000, scoped, tag = 'internal scratch']
  %s0 = inlined_call_operand.vmem [shape: f32[16,16], index: 0, kind: input, shape index: {}]
  %s1 = inlined_call_operand.vmem [shape: f32[2,16,1], index: 1, kind: input, shape index: {}]
  %s2 = inlined_call_operand.vmem [shape: f32[16,16], index: 2, kind: output, shape index: {}]
  %s3 = sld [smem:[#allocation0]]
  $region18: #{complex_batch_norm_1d.3} parent=0
    _
  %s5 = ssub.s32 1, %s3
  %s6 = scalar_select 0, %s5, %s3
  // Predicated region
  $region2: #{complex_batch_norm_1d.3} parent=0 // pred_check
    _
  $region3: #{complex_batch_norm_1d.3} parent=0 // pred_check_branch
    %8 = sbr.rel (0) target = $region5
  $region4: #{complex_batch_norm_1d.3} parent=0 // pred_region
    _
  $region5: #{complex_batch_norm_1d.3} parent=0 // pred_fallthru
    _
  // Predicated region
  $region6: #{complex_batch_norm_1d.3} parent=0 // pred_check
    _
  $region7: #{complex_batch_norm_1d.3} parent=0 // pred_check_branch
    %10 = sbr.rel (0) target = $region9
  $region8: #{complex_batch_norm_1d.3} parent=0 // pred_region
    _
  $region9: #{complex_batch_norm_1d.3} parent=0 // pred_fallthru
    _
  %v11 = vld [vmem:[%s0] sm:$0xff]
  %v12 = vld [vmem:[%s0 + $0x8] sm:$0xff]
  %v13 = vld [vmem:[%s1] sm:$0xff]
  %v14 = vld [vmem:[%s1 + $0x8] sm:$0xff]
  %16 = vset.pattern.permute.xlu0 0
  %17 = vperm.xlu0 %16, %v13
  %v18 = vpop.permute.xlu0 %17
  %21 = vset.pattern.permute.xlu0 0
  %22 = vperm.xlu0 %21, %v14
  %v23 = vpop.permute.xlu0 %22
  %v25 = vmul.f32 %v11, %v18
  %v26 = vmul.f32 %v12, %v23
  %s27 = scalar_lea.vmem %s1, 16
  %v28 = vld [vmem:[%s27] sm:$0xff]
  %v29 = vld [vmem:[%s27 + $0x8] sm:$0xff]
  %31 = vset.pattern.permute.xlu0 0
  %32 = vperm.xlu0 %31, %v28
  %v33 = vpop.permute.xlu0 %32
  %36 = vset.pattern.permute.xlu0 0
  %37 = vperm.xlu0 %36, %v29
  %v38 = vpop.permute.xlu0 %37
  %v40 = vadd.f32 %v25, %v33
  %v41 = vadd.f32 %v26, %v38
  %vm42 = vcmask 130048
  %43 = vst.msk [vmem:[%s2] sm:$0xff] %vm42, %v40
  %44 = vst.msk [vmem:[%s2 + $0x8] sm:$0xff] %vm42, %v41
  // Predicated region
  $region10: #{complex_batch_norm_1d.3} parent=0 // pred_check
    _
  $region11: #{complex_batch_norm_1d.3} parent=0 // pred_check_branch
    %46 = sbr.rel (0) target = $region13
  $region12: #{complex_batch_norm_1d.3} parent=0 // pred_region
    _
  $region13: #{complex_batch_norm_1d.3} parent=0 // pred_fallthru
    _
  // Predicated region
  $region14: #{complex_batch_norm_1d.3} parent=0 // pred_check
    _
  $region15: #{complex_batch_norm_1d.3} parent=0 // pred_check_branch
    %48 = sbr.rel (0) target = $region17
  $region16: #{complex_batch_norm_1d.3} parent=0 // pred_region
    _
  $region17: #{complex_batch_norm_1d.3} parent=0 // pred_fallthru
    _

// kernel: complex_batch_norm_1d.2
$region0: #{complex_batch_norm_1d.2}
  #allocation0 [shape = 'u32[]', space=smem, size = 0x4, offset = 0x4, fixed_abs, tag = 'smem constant byte address 0x4 - core index']
  #allocation1 [shape = 'u32[72,128]{1,0:T(1,128)}', space=vmem, size = 0x9000, scoped, tag = 'internal scratch']
  %s0 = inlined_call_operand.vmem [shape: f32[16,16], index: 0, kind: input, shape index: {}]
  %s1 = inlined_call_operand.vmem [shape: f32[1,16,1], index: 1, kind: output, shape index: {0}]
  %s2 = inlined_call_operand.vmem [shape: f32[1,16,1], index: 2, kind: output, shape index: {1}]
  %3 = xla_tuple %s1, %s2
  %s4 = sld [smem:[#allocation0]]
  $region22: #{complex_batch_norm_1d.2} parent=0
    _
  %s6 = ssub.s32 1, %s4
  %s7 = scalar_select 0, %s6, %s4
  // Predicated region
  $region2: #{complex_batch_norm_1d.2} parent=0 // pred_check
    _
  $region3: #{complex_batch_norm_1d.2} parent=0 // pred_check_branch
    %9 = sbr.rel (0) target = $region5
  $region4: #{complex_batch_norm_1d.2} parent=0 // pred_region
    _
  $region5: #{complex_batch_norm_1d.2} parent=0 // pred_fallthru
    _
  %v10 = vld [vmem:[%s0] sm:$0xff]
  %v11 = vld [vmem:[%s0 + $0x8] sm:$0xff]
  %vm12 = vcmask 130048
  %v13 = vsel %vm12, %v10, 0.0
  %14 = vadd.xlane.f32.xlu0 %v13
  %v15 = vpop.xlane.xlu0 %14
  %v16 = vsel %vm12, %v11, 0.0
  %17 = vadd.xlane.f32.xlu0 %v16
  %v18 = vpop.xlane.xlu0 %17
  %v19 = vrcp.pop 16.0
  %v20 = vmul.f32 16.0, %v19
  %v21 = vsub.f32 1.0, %v20
  %v22 = vmul.f32 %v19, %v21
  %v23 = vadd.f32 %v19, %v22
  %vm24 = vweird.f32 %v19
  %v25 = vsel %vm24, %v19, %v23
  %v26 = vmul.f32 %v15, %v25
  %v27 = vmul.f32 %v18, %v25
  %v28 = vsub.f32 %v10, %v26
  %v29 = vsub.f32 %v11, %v27
  %v30 = vmul.f32 %v28, %v28
  %v31 = vmul.f32 %v29, %v29
  %v32 = vsel %vm12, %v30, 0.0
  %33 = vadd.xlane.f32.xlu0 %v32
  %v34 = vpop.xlane.xlu0 %33
  %v35 = vsel %vm12, %v31, 0.0
  %36 = vadd.xlane.f32.xlu0 %v35
  %v37 = vpop.xlane.xlu0 %36
  %vm38 = vcmask 7168
  %39 = vst.msk [vmem:[%s1] sm:$0xff] %vm38, %v15
  %40 = vst.msk [vmem:[%s1 + $0x8] sm:$0xff] %vm38, %v18
  %41 = vst.msk [vmem:[%s2] sm:$0xff] %vm38, %v34
  %42 = vst.msk [vmem:[%s2 + $0x8] sm:$0xff] %vm38, %v37
  // Predicated region
  $region6: #{complex_batch_norm_1d.2} parent=0 // pred_check
    _
  $region7: #{complex_batch_norm_1d.2} parent=0 // pred_check_branch
    %44 = sbr.rel (0) target = $region9
  $region8: #{complex_batch_norm_1d.2} parent=0 // pred_region
    _
  $region9: #{complex_batch_norm_1d.2} parent=0 // pred_fallthru
    _
  // Predicated region
  $region10: #{complex_batch_norm_1d.2} parent=0 // pred_check
    _
  $region11: #{complex_batch_norm_1d.2} parent=0 // pred_check_branch
    %46 = sbr.rel (0) target = $region13
  $region12: #{complex_batch_norm_1d.2} parent=0 // pred_region
    _
  $region13: #{complex_batch_norm_1d.2} parent=0 // pred_fallthru
    _
  // Predicated region
  $region14: #{complex_batch_norm_1d.2} parent=0 // pred_check
    _
  $region15: #{complex_batch_norm_1d.2} parent=0 // pred_check_branch
    %48 = sbr.rel (0) target = $region17
  $region16: #{complex_batch_norm_1d.2} parent=0 // pred_region
    _
  $region17: #{complex_batch_norm_1d.2} parent=0 // pred_fallthru
    _
  // Predicated region
  $region18: #{complex_batch_norm_1d.2} parent=0 // pred_check
    _
  $region19: #{complex_batch_norm_1d.2} parent=0 // pred_check_branch
    %50 = sbr.rel (0) target = $region21
  $region20: #{complex_batch_norm_1d.2} parent=0 // pred_region
    _
  $region21: #{complex_batch_norm_1d.2} parent=0 // pred_fallthru
    _

</llo_original>
